<compile_context>
chip_gen: v7x
topology: tpu7x:2x2x1
jax: 0.10.0
libtpu: 0.0.40
codegen_flags: <defaults>
</compile_context>

<pallas_src>
import math

import jax
import jax.numpy as jnp
from jax.experimental import pallas as pl
from jax.experimental.pallas import tpu as pltpu


def _round_up(a, b):
    return (a + b - 1) // b * b


def _gelu_exact(x):
    # nn.GELU() default = exact erf-based GELU.
    return 0.5 * x * (1.0 + jax.lax.erf(x * (1.0 / math.sqrt(2.0))))


def _vmem_capacity_bytes():
    try:
        return int(pltpu.get_tpu_info().vmem_capacity_bytes)
    except Exception:
        return 128 * 1024 * 1024  # conservative default (v5e/v6e class)


def _pick_tk(d_ff_p, tk_max):
    """Largest multiple of 128 <= tk_max that divides d_ff_p (d_ff_p % 128 == 0)."""
    t = min(tk_max, d_ff_p)
    t = max((t // 128) * 128, 128)
    while t > 128 and d_ff_p % t != 0:
        t -= 128
    return t


def _pick_tm(d_model_p, tk, in_itemsize, out_itemsize, vmem_budget):
    """Largest row tile whose per-step VMEM footprint fits the budget."""
    for tm in (2048, 1536, 1024, 768, 512, 384, 256, 128):
        footprint = (
            2 * tm * d_model_p * in_itemsize        # x tile, double-buffered
            + 2 * tk * d_model_p * in_itemsize * 2  # W1 + W2 chunks, double-buffered
            + 2 * tm * d_model_p * out_itemsize     # out tile, double-buffered
            + tm * d_model_p * 4                    # f32 accumulator scratch
        )
        if footprint <= vmem_budget:
            return tm
    return 128


def ffn_kernel(x_ref, w1_ref, w2_ref, o_ref, acc_ref):
    # x_ref : (tm, d_model_p)     token tile (native dtype)
    # w1_ref: (tk, d_model_p)     contiguous row-slab of W1 (d_ff-chunk)
    # w2_ref: (tk, d_model_p)     contiguous row-slab of W2^T (d_ff-chunk)
    # acc_ref: (tm, d_model_p)    f32 accumulator, resident across the k axis
    k = pl.program_id(1)

    @pl.when(k == 0)
    def _():
        acc_ref[...] = jnp.zeros_like(acc_ref)

    # h = x @ W1_chunk^T : contract x's last dim with the chunk's last dim.
    h = jax.lax.dot_general(
        x_ref[...], w1_ref[...],
        dimension_numbers=(((1,), (1,)), ((), ())),
        preferred_element_type=jnp.float32)
    h = _gelu_exact(h)
    acc_ref[...] += jnp.dot(h.astype(w2_ref.dtype), w2_ref[...],
                            preferred_element_type=jnp.float32)

    @pl.when(k == pl.num_programs(1) - 1)
    def _():
        o_ref[...] = acc_ref[...].astype(o_ref.dtype)


def _maybe_pad2d(a, rows, cols):
    if a.shape == (rows, cols):
        return a
    return jnp.pad(a, ((0, rows - a.shape[0]), (0, cols - a.shape[1])))


def ffn_pallas(x, w1, w2_t, *, tk_ff=256, use_bf16=False):
    """FFN forward.

    x    : (..., d_model)
    w1   : (d_ff, d_model)   == nn.Linear(d_model, d_ff).weight (native layout)
    w2_t : (d_ff, d_model)   == nn.Linear(d_ff, d_model).weight.T
    """
    orig_shape = x.shape
    orig_dtype = x.dtype
    d_model = orig_shape[-1]
    d_ff = w1.shape[0]

    if use_bf16:
        # Numerics trade-off: bf16 operands (f32 accumulation kept in-kernel).
        x = x.astype(jnp.bfloat16)
        w1 = w1.astype(jnp.bfloat16)
        w2_t = w2_t.astype(jnp.bfloat16)

    x2d = x.reshape(-1, d_model)
    n = x2d.shape[0]
    in_itemsize = x2d.dtype.itemsize
    out_itemsize = jnp.dtype(orig_dtype).itemsize

    # Lane-dense padding targets: last dims multiples of 128.
    d_model_p = _round_up(d_model, 128)
    d_ff_p = _round_up(d_ff, 128)

    # d_ff tile: divisor of d_ff_p (no wasted zero-matmul columns).
    tk = _pick_tk(d_ff_p, tk_ff)

    # VMEM budget: physical capacity minus headroom for Mosaic internals.
    vmem_cap = _vmem_capacity_bytes()
    vmem_limit = max(vmem_cap - (32 << 20), (vmem_cap * 3) // 4)
    tm = _pick_tm(d_model_p, tk, in_itemsize, out_itemsize,
                  vmem_budget=int(vmem_limit * 0.85))

    # Tiny-N path: cap the row tile at the dtype-native sublane packing.
    sublane = 8 * (4 // in_itemsize)          # 8 (f32), 16 (bf16), 32 (int8/fp8)
    tm_eff = min(tm, _round_up(n, sublane))
    n_p = _round_up(n, tm_eff)

    # Zero-pad only when needed (GELU(0) == 0, so padding is exact).
    # TODO(synk): in a real model, pre-pad W1/W2 once outside the hot path.
    x_p = _maybe_pad2d(x2d, n_p, d_model_p)
    w1_p = _maybe_pad2d(w1, d_ff_p, d_model_p)
    w2_p = _maybe_pad2d(w2_t, d_ff_p, d_model_p)

    grid = (n_p // tm_eff, d_ff_p // tk)

    # Truthful HBM traffic: weights are re-streamed once per row tile.
    cost = pl.CostEstimate(
        flops=4 * n * d_model * d_ff,
        transcendentals=n * d_ff,
        bytes_accessed=(grid[0] * (w1_p.size * w1_p.dtype.itemsize
                                   + w2_p.size * w2_p.dtype.itemsize)
                        + x_p.size * x_p.dtype.itemsize
                        + n_p * d_model_p * out_itemsize),
    )

    out2d = pl.pallas_call(
        ffn_kernel,
        out_shape=jax.ShapeDtypeStruct((n_p, d_model_p), orig_dtype),
        grid_spec=pltpu.PrefetchScalarGridSpec(
            num_scalar_prefetch=0,
            grid=grid,
            in_specs=[
                pl.BlockSpec((tm_eff, d_model_p), lambda i, k: (i, 0)),  # tokens
                pl.BlockSpec((tk, d_model_p), lambda i, k: (k, 0)),      # W1 row slab
                pl.BlockSpec((tk, d_model_p), lambda i, k: (k, 0)),      # W2^T row slab
            ],
            out_specs=pl.BlockSpec((tm_eff, d_model_p), lambda i, k: (i, 0)),
            scratch_shapes=[pltpu.VMEM((tm_eff, d_model_p), jnp.float32)],
        ),
        compiler_params=pltpu.CompilerParams(
            dimension_semantics=("parallel", "arbitrary"),
            vmem_limit_bytes=int(vmem_limit),
        ),
        cost_estimate=cost,
    )(x_p, w1_p, w2_p)

    return out2d[:n, :d_model].reshape(orig_shape)


def ffn_reference(x, w1, w2_t):
    h = jnp.dot(x, w1.T)
    h = _gelu_exact(h)
    return jnp.dot(h, w2_t).astype(x.dtype)


if __name__ == "__main__":
    # Small shapes consistent with the module: tokens of width d_model.
    batch, seq, d_model, d_ff = 2, 8, 32, 64

    key = jax.random.PRNGKey(0)
    kx, k1, k2 = jax.random.split(key, 3)

    x = jax.random.normal(kx, (batch, seq, d_model), dtype=jnp.float32)

    # nn.Linear weights: w_1.weight (d_ff, d_model), w_2.weight (d_model, d_ff).
    bound1 = 1.0 / math.sqrt(d_model)
    bound2 = 1.0 / math.sqrt(d_ff)
    w1 = jax.random.uniform(k1, (d_ff, d_model), jnp.float32, -bound1, bound1)
    w2 = jax.random.uniform(k2, (d_model, d_ff), jnp.float32, -bound2, bound2)
    w2_t = w2.T  # (d_ff, d_model)

    out = ffn_pallas(x, w1, w2_t)
    jax.block_until_ready(out)

    ref = ffn_reference(x, w1, w2_t)
    assert out.shape == x.shape
    assert jnp.allclose(out, ref, atol=1e-5, rtol=1e-5), "mismatch vs reference"

    # Second, ragged-shape check (exercises the padding / divisor-tk paths).
    x2 = jax.random.normal(k2, (3, 5, 48), dtype=jnp.float32)
    w1b = jax.random.uniform(k1, (160, 48), jnp.float32, -0.1, 0.1)
    w2b = jax.random.uniform(kx, (48, 160), jnp.float32, -0.1, 0.1)
    out2 = ffn_pallas(x2, w1b, w2b.T)
    jax.block_until_ready(out2)
    ref2 = ffn_reference(x2, w1b, w2b.T)
    assert out2.shape == x2.shape
    assert jnp.allclose(out2, ref2, atol=1e-5, rtol=1e-5), "mismatch vs reference (ragged)"

    print("KERNEL_OK")
</pallas_src>

<mosaic_0001>
module attributes {stable_mosaic.version = 11 : i64} {
  func.func @ffn_kernel(%arg0: i32, %arg1: i32, %arg2: memref<16x128xf32, #tpu.memory_space<vmem>>, %arg3: memref<128x128xf32, #tpu.memory_space<vmem>>, %arg4: memref<128x128xf32, #tpu.memory_space<vmem>>, %arg5: memref<16x128xf32, #tpu.memory_space<vmem>>, %arg6: memref<16x128xf32, #tpu.memory_space<vmem>>) attributes {dimension_semantics = [#tpu.dimension_semantics<parallel>, #tpu.dimension_semantics<arbitrary>], iteration_bounds = array<i64: 1, 1>, scalar_prefetch = 0 : i64, scratch_operands = 1 : i64, tpu.core_type = #tpu.core_type<tc>, window_params = [{transform_indices = @transform_0, window_bounds = array<i64: 16, 128>}, {transform_indices = @transform_1, window_bounds = array<i64: 128, 128>}, {transform_indices = @transform_2, window_bounds = array<i64: 128, 128>}, {transform_indices = @transform_3, window_bounds = array<i64: 16, 128>}]} {
    %c0_i32 = arith.constant 0 : i32
    %0 = arith.cmpi eq, %arg1, %c0_i32 : i32
    %1 = arith.extui %0 : i1 to i32
    %c0_i32_0 = arith.constant 0 : i32
    %2 = arith.cmpi ne, %1, %c0_i32_0 : i32
    scf.if %2 {
      %cst_16 = arith.constant 0.000000e+00 : f32
      %22 = vector.broadcast %cst_16 : f32 to vector<16x128xf32>
      %c0_17 = arith.constant 0 : index
      %c0_18 = arith.constant 0 : index
      %23 = vector.load %arg6[%c0_17, %c0_18] : memref<16x128xf32, #tpu.memory_space<vmem>>, vector<16x128xf32>
      tpu.vector_store %arg6[%c0_17, %c0_18], %22 {strides = array<i32>} : memref<16x128xf32, #tpu.memory_space<vmem>>, vector<16x128xf32>,
    } else {
    }
    %c0 = arith.constant 0 : index
    %c0_1 = arith.constant 0 : index
    %3 = vector.load %arg2[%c0, %c0_1] : memref<16x128xf32, #tpu.memory_space<vmem>>, vector<16x128xf32>
    %c0_2 = arith.constant 0 : index
    %c0_3 = arith.constant 0 : index
    %4 = vector.load %arg3[%c0_2, %c0_3] : memref<128x128xf32, #tpu.memory_space<vmem>>, vector<128x128xf32>
    %cst = arith.constant dense<0.000000e+00> : vector<16x128xf32>
    %5 = tpu.matmul %3, %4, %cst {dimension_numbers = #tpu.dot_dimension_numbers<[1], [1], [0], [0], [0, 0, 1, 0], [], []>} : vector<16x128xf32>, vector<128x128xf32>, vector<16x128xf32> -> vector<16x128xf32>
    %cst_4 = arith.constant 5.000000e-01 : f32
    %6 = vector.broadcast %cst_4 : f32 to vector<16x128xf32>
    %7 = arith.mulf %6, %5 : vector<16x128xf32>
    %cst_5 = arith.constant 0.707106769 : f32
    %8 = vector.broadcast %cst_5 : f32 to vector<16x128xf32>
    %9 = arith.mulf %5, %8 : vector<16x128xf32>
    %10 = math.erf %9 : vector<16x128xf32>
    %cst_6 = arith.constant 1.000000e+00 : f32
    %11 = vector.broadcast %cst_6 : f32 to vector<16x128xf32>
    %12 = arith.addf %11, %10 : vector<16x128xf32>
    %13 = arith.mulf %7, %12 : vector<16x128xf32>
    %c0_7 = arith.constant 0 : index
    %c0_8 = arith.constant 0 : index
    %14 = vector.load %arg6[%c0_7, %c0_8] : memref<16x128xf32, #tpu.memory_space<vmem>>, vector<16x128xf32>
    %c0_9 = arith.constant 0 : index
    %c0_10 = arith.constant 0 : index
    %15 = vector.load %arg4[%c0_9, %c0_10] : memref<128x128xf32, #tpu.memory_space<vmem>>, vector<128x128xf32>
    %cst_11 = arith.constant dense<0.000000e+00> : vector<16x128xf32>
    %16 = tpu.matmul %13, %15, %cst_11 {dimension_numbers = #tpu.dot_dimension_numbers<[1], [0], [0], [1], [0, 0, 1, 1], [], []>} : vector<16x128xf32>, vector<128x128xf32>, vector<16x128xf32> -> vector<16x128xf32>
    %17 = arith.addf %14, %16 : vector<16x128xf32>
    %c0_12 = arith.constant 0 : index
    %c0_13 = arith.constant 0 : index
    %18 = vector.load %arg6[%c0_12, %c0_13] : memref<16x128xf32, #tpu.memory_space<vmem>>, vector<16x128xf32>
    tpu.vector_store %arg6[%c0_12, %c0_13], %17 {strides = array<i32>} : memref<16x128xf32, #tpu.memory_space<vmem>>, vector<16x128xf32>,
    %c0_i32_14 = arith.constant 0 : i32
    %19 = arith.cmpi eq, %arg1, %c0_i32_14 : i32
    %20 = arith.extui %19 : i1 to i32
    %c0_i32_15 = arith.constant 0 : i32
    %21 = arith.cmpi ne, %20, %c0_i32_15 : i32
    scf.if %21 {
      %c0_16 = arith.constant 0 : index
      %c0_17 = arith.constant 0 : index
      %22 = vector.load %arg6[%c0_16, %c0_17] : memref<16x128xf32, #tpu.memory_space<vmem>>, vector<16x128xf32>
      %c0_18 = arith.constant 0 : index
      %c0_19 = arith.constant 0 : index
      %23 = vector.load %arg5[%c0_18, %c0_19] : memref<16x128xf32, #tpu.memory_space<vmem>>, vector<16x128xf32>
      tpu.vector_store %arg5[%c0_18, %c0_19], %22 {strides = array<i32>} : memref<16x128xf32, #tpu.memory_space<vmem>>, vector<16x128xf32>,
    } else {
    }
    return
  }
  func.func @transform_0(%arg0: i32, %arg1: i32) -> (i32, i32) {
    %c0_i32 = arith.constant 0 : i32
    %c0_i32_0 = arith.constant 0 : i32
    return %arg0, %c0_i32 : i32, i32
  }
  func.func @transform_1(%arg0: i32, %arg1: i32) -> (i32, i32) {
    %c0_i32 = arith.constant 0 : i32
    %c0_i32_0 = arith.constant 0 : i32
    return %arg1, %c0_i32 : i32, i32
  }
  func.func @transform_2(%arg0: i32, %arg1: i32) -> (i32, i32) {
    %c0_i32 = arith.constant 0 : i32
    %c0_i32_0 = arith.constant 0 : i32
    return %arg1, %c0_i32 : i32, i32
  }
  func.func @transform_3(%arg0: i32, %arg1: i32) -> (i32, i32) {
    %c0_i32 = arith.constant 0 : i32
    %c0_i32_0 = arith.constant 0 : i32
    return %arg0, %c0_i32 : i32, i32
  }
}

</mosaic_0001>

<llo_original>
// kernel: tpu_custom_call.1
$region0: #{tpu_custom_call.1}
  #allocation0 [shape = 'u32[]', space=smem, size = 0x4, offset = 0x4, fixed_abs, tag = 'smem constant byte address 0x4 - core index']
  #allocation1 [shape = 'u32[144,128]{1,0:T(1,128)}', space=vmem, size = 0x12000, scoped, tag = 'internal scratch']
  #allocation2 [shape = 'f32[16,128]{1,0:T(8,128)}', space=vmem, size = 0x2000, scoped, tag = 'scratch operand']
  %s0 = inlined_call_operand.hbm [shape: f32[16,128], index: 0, kind: input, shape index: {}]
  %s1 = inlined_call_operand.hbm [shape: f32[128,128], index: 1, kind: input, shape index: {}]
  %s2 = inlined_call_operand.hbm [shape: f32[128,128], index: 2, kind: input, shape index: {}]
  %s3 = inlined_call_operand.hbm [shape: f32[16,128], index: 3, kind: output, shape index: {}]
  %s4 = sld [smem:[#allocation0]]
  $region42: #{tpu_custom_call.1} parent=0
    _
  %s6 = ssub.s32 1, %s4
  %s7 = scalar_select 0, %s6, %s4
  $region1: #{tpu_custom_call.1} parent=0
    #allocation3 [shape = 'u8[8192]{0}', space=vmem, size = 0x2000, scoped, tag = 'input window, operand 0, single buffered']
    #allocation4 [shape = 's32[1]{0}', space=sflag, size = 0x4, scoped, tag = 'scoped memory for tpu_custom_call.1']
    #allocation5 [shape = 's32[1]{0}', space=sflag, size = 0x4, scoped, tag = 'scoped memory for tpu_custom_call.1']
    #allocation6 [shape = 'u8[65536]{0}', space=vmem, size = 0x10000, scoped, tag = 'input window, operand 1, single buffered']
    #allocation7 [shape = 's32[1]{0}', space=sflag, size = 0x4, scoped, tag = 'scoped memory for tpu_custom_call.1']
    #allocation8 [shape = 'u8[65536]{0}', space=vmem, size = 0x10000, scoped, tag = 'input window, operand 2, single buffered']
    #allocation9 [shape = 'u8[8192]{0}', space=vmem, size = 0x2000, scoped, tag = 'output window, operand 0, single buffered']
    %8 = vsyncpa [#allocation4], 0
    %9 = vsyncpa [#allocation7], 0
    %10 = vsyncpa [#allocation5], 0
    // Predicated region
    $region2: #{tpu_custom_call.1} parent=1 // pred_check
      _
    $region3: #{tpu_custom_call.1} parent=1 // pred_check_branch
      %12 = sbr.rel (0) target = $region5
    $region4: #{tpu_custom_call.1} parent=1 // pred_region
      %s14 = ssub.s32 256, 256
      %15 = vsyncadd [#allocation4], %s14
      %s16 = sshll.u32 [#allocation3], 4
      %s17 = int_to_ptr.vmem [resolvable:$true] %s16
      %22 = dma.hbm_to_vmem [thread:$0]  %s0, 256, %s17, [#allocation4], 128, 128, 8
    $region5: #{tpu_custom_call.1} parent=1 // pred_fallthru
      _
    // Predicated region
    $region6: #{tpu_custom_call.1} parent=1 // pred_check
      _
    $region7: #{tpu_custom_call.1} parent=1 // pred_check_branch
      %24 = sbr.rel (0) target = $region9
    $region8: #{tpu_custom_call.1} parent=1 // pred_region
      %s26 = ssub.s32 2048, 2048
      %27 = vsyncadd [#allocation7], %s26
      %s28 = sshll.u32 [#allocation6], 4
      %s29 = int_to_ptr.vmem [resolvable:$true] %s28
      %34 = dma.hbm_to_vmem [thread:$0]  %s1, 2048, %s29, [#allocation7], 128, 128, 8
    $region9: #{tpu_custom_call.1} parent=1 // pred_fallthru
      _
    // Predicated region
    $region10: #{tpu_custom_call.1} parent=1 // pred_check
      _
    $region11: #{tpu_custom_call.1} parent=1 // pred_check_branch
      %36 = sbr.rel (0) target = $region13
    $region12: #{tpu_custom_call.1} parent=1 // pred_region
      %s38 = ssub.s32 2048, 2048
      %39 = vsyncadd [#allocation7], %s38
      %s40 = sshll.u32 [#allocation8], 4
      %s41 = int_to_ptr.vmem [resolvable:$true] %s40
      %46 = dma.hbm_to_vmem [thread:$0]  %s2, 2048, %s41, [#allocation7], 128, 128, 8
    $region13: #{tpu_custom_call.1} parent=1 // pred_fallthru
      _
    // Predicated region
    $region14: #{tpu_custom_call.1} parent=1 // pred_check
      _
    $region15: #{tpu_custom_call.1} parent=1 // pred_check_branch
      %48 = sbr.rel (0) target = $region17
    $region16: #{tpu_custom_call.1} parent=1 // pred_region
      %49 = dma.done [#allocation4], 256
    $region17: #{tpu_custom_call.1} parent=1 // pred_fallthru
      _
    // Predicated region
    $region18: #{tpu_custom_call.1} parent=1 // pred_check
      _
    $region19: #{tpu_custom_call.1} parent=1 // pred_check_branch
      %51 = sbr.rel (0) target = $region21
    $region20: #{tpu_custom_call.1} parent=1 // pred_region
      %52 = dma.done [#allocation7], 2048
    $region21: #{tpu_custom_call.1} parent=1 // pred_fallthru
      _
    // Predicated region
    $region22: #{tpu_custom_call.1} parent=1 // pred_check
      _
    $region23: #{tpu_custom_call.1} parent=1 // pred_check_branch
      %54 = sbr.rel (0) target = $region25
    $region24: #{tpu_custom_call.1} parent=1 // pred_region
      %55 = dma.done [#allocation7], 2048
    $region25: #{tpu_custom_call.1} parent=1 // pred_fallthru
      _
    %p56 = scmp.eq.s32.totalorder 0, 0
    // Predicated region
    $region26: #{tpu_custom_call.1} parent=1 // pred_check
      %p57 = pneg %p56
    $region27: #{tpu_custom_call.1} parent=1 // pred_check_branch
      %59 = sbr.rel (%p57) target = $region29
    $region28: #{tpu_custom_call.1} parent=1 // pred_region
      %60 = vst [vmem:[#allocation2] sm:$0xff] 0.0
      %61 = vst [vmem:[#allocation2 + $0x8] sm:$0xff] 0.0
    $region29: #{tpu_custom_call.1} parent=1 // pred_fallthru
      _
    %v62 = vld [vmem:[#allocation3] sm:$0xff]
    %v63 = vld [vmem:[#allocation3 + $0x8] sm:$0xff]
    %v64 = vld [vmem:[#allocation6] sm:$0xff]
    %v65 = vld [vmem:[#allocation6 + $0x8] sm:$0xff]
    %v66 = vld [vmem:[#allocation6 + $0x10] sm:$0xff]
    %v67 = vld [vmem:[#allocation6 + $0x18] sm:$0xff]
    %v68 = vld [vmem:[#allocation6 + $0x20] sm:$0xff]
    %v69 = vld [vmem:[#allocation6 + $0x28] sm:$0xff]
    %v70 = vld [vmem:[#allocation6 + $0x30] sm:$0xff]
    %v71 = vld [vmem:[#allocation6 + $0x38] sm:$0xff]
    %v72 = vld [vmem:[#allocation6 + $0x40] sm:$0xff]
    %v73 = vld [vmem:[#allocation6 + $0x48] sm:$0xff]
    %v74 = vld [vmem:[#allocation6 + $0x50] sm:$0xff]
    %v75 = vld [vmem:[#allocation6 + $0x58] sm:$0xff]
    %v76 = vld [vmem:[#allocation6 + $0x60] sm:$0xff]
    %v77 = vld [vmem:[#allocation6 + $0x68] sm:$0xff]
    %v78 = vld [vmem:[#allocation6 + $0x70] sm:$0xff]
    %v79 = vld [vmem:[#allocation6 + $0x78] sm:$0xff]
    %80 = vmatprep.subr.mxu0 0.0
    %81 = vmatpush1.xpose.msra.mxu0 %v64
    %82 = vmatprep.subr.mxu0 0.0
    %83 = vmatpush1.xpose.msra.mxu0 %v65
    %84 = vmatprep.subr.mxu0 0.0
    %85 = vmatpush1.xpose.msra.mxu0 %v66
    %86 = vmatprep.subr.mxu0 0.0
    %87 = vmatpush1.xpose.msra.mxu0 %v67
    %88 = vmatprep.subr.mxu0 0.0
    %89 = vmatpush1.xpose.msra.mxu0 %v68
    %90 = vmatprep.subr.mxu0 0.0
    %91 = vmatpush1.xpose.msra.mxu0 %v69
    %92 = vmatprep.subr.mxu0 0.0
    %93 = vmatpush1.xpose.msra.mxu0 %v70
    %94 = vmatprep.subr.mxu0 0.0
    %95 = vmatpush1.xpose.msra.mxu0 %v71
    %96 = vmatprep.subr.mxu0 0.0
    %97 = vmatpush1.xpose.msra.mxu0 %v72
    %98 = vmatprep.subr.mxu0 0.0
    %99 = vmatpush1.xpose.msra.mxu0 %v73
    %100 = vmatprep.subr.mxu0 0.0
    %101 = vmatpush1.xpose.msra.mxu0 %v74
    %102 = vmatprep.subr.mxu0 0.0
    %103 = vmatpush1.xpose.msra.mxu0 %v75
    %104 = vmatprep.subr.mxu0 0.0
    %105 = vmatpush1.xpose.msra.mxu0 %v76
    %106 = vmatprep.subr.mxu0 0.0
    %107 = vmatpush1.xpose.msra.mxu0 %v77
    %108 = vmatprep.subr.mxu0 0.0
    %109 = vmatpush1.xpose.msra.mxu0 %v78
    %110 = vmatprep.subr.mxu0 0.0
    %111 = vmatpush1.xpose.msra.mxu0 %v79
    %112 = vmatprep.subr.mxu0 0.0
    %113 = vmatpush1.xpose.msra.mxu0 0.0
    %114 = vmatprep.subr.mxu0 0.0
    %115 = vmatpush1.xpose.msra.mxu0 0.0
    %116 = vmatprep.subr.mxu0 0.0
    %117 = vmatpush1.xpose.msra.mxu0 0.0
    %118 = vmatprep.subr.mxu0 0.0
    %119 = vmatpush1.xpose.msra.mxu0 0.0
    %120 = vmatprep.subr.mxu0 0.0
    %121 = vmatpush1.xpose.msra.mxu0 0.0
    %122 = vmatprep.subr.mxu0 0.0
    %123 = vmatpush1.xpose.msra.mxu0 0.0
    %124 = vmatprep.subr.mxu0 0.0
    %125 = vmatpush1.xpose.msra.mxu0 0.0
    %126 = vmatprep.subr.mxu0 0.0
    %127 = vmatpush1.xpose.msra.mxu0 0.0
    %128 = vmatprep.subr.mxu0 0.0
    %129 = vmatpush1.xpose.msra.mxu0 0.0
    %130 = vmatprep.subr.mxu0 0.0
    %131 = vmatpush1.xpose.msra.mxu0 0.0
    %132 = vmatprep.subr.mxu0 0.0
    %133 = vmatpush1.xpose.msra.mxu0 0.0
    %134 = vmatprep.subr.mxu0 0.0
    %135 = vmatpush1.xpose.msra.mxu0 0.0
    %136 = vmatprep.subr.mxu0 0.0
    %137 = vmatpush1.xpose.msra.mxu0 0.0
    %138 = vmatprep.subr.mxu0 0.0
    %139 = vmatpush1.xpose.msra.mxu0 0.0
    %140 = vmatprep.subr.mxu0 0.0
    %141 = vmatpush1.xpose.msra.mxu0 0.0
    %142 = vmatprep.subr.mxu0 0.0
    %143 = vmatpush1.xpose.msra.mxu0 0.0
    %144 = vmatprep.mubr.f32.mxu0 0.0
    %145 = vmatmul.mubr.f32.gmra.mrb[0].mxu0 %v62
    %v146 = vpop.f32.mrb[0].mxu0
    %v147 = vadd.f32 0.0, %v146
    %v148 = vpop.f32.mrb[0].mxu0
    %149 = vmatprep.mubr.f32.mxu0 0.0
    %150 = vmatmul.mubr.f32.gmra.mrb[0].mxu0 %v63
    %v151 = vpop.f32.mrb[0].mxu0
    %v152 = vadd.f32 0.0, %v151
    %v153 = vpop.f32.mrb[0].mxu0
    %154 = vdwg.mxu0
    %v155 = vmul.f32 %v147, 0.5
    %v156 = vmul.f32 %v152, 0.5
    %v157 = vmul.f32 %v147, 0.70710677
    %v158 = vmul.f32 %v152, 0.70710677
    %v159 = verf.f32.pop %v157
    %v160 = verf.f32.pop %v158
    %v161 = vadd.f32 %v159, 1.0
    %v162 = vadd.f32 %v160, 1.0
    %v163 = vmul.f32 %v155, %v161
    %v164 = vmul.f32 %v156, %v162
    %v165 = vld [vmem:[#allocation2] sm:$0xff]
    %v166 = vld [vmem:[#allocation2 + $0x8] sm:$0xff]
    %v167 = vld [vmem:[#allocation8] sm:$0xff]
    %v168 = vld [vmem:[#allocation8 + $0x8] sm:$0xff]
    %v169 = vld [vmem:[#allocation8 + $0x10] sm:$0xff]
    %v170 = vld [vmem:[#allocation8 + $0x18] sm:$0xff]
    %v171 = vld [vmem:[#allocation8 + $0x20] sm:$0xff]
    %v172 = vld [vmem:[#allocation8 + $0x28] sm:$0xff]
    %v173 = vld [vmem:[#allocation8 + $0x30] sm:$0xff]
    %v174 = vld [vmem:[#allocation8 + $0x38] sm:$0xff]
    %v175 = vld [vmem:[#allocation8 + $0x40] sm:$0xff]
    %v176 = vld [vmem:[#allocation8 + $0x48] sm:$0xff]
    %v177 = vld [vmem:[#allocation8 + $0x50] sm:$0xff]
    %v178 = vld [vmem:[#allocation8 + $0x58] sm:$0xff]
    %v179 = vld [vmem:[#allocation8 + $0x60] sm:$0xff]
    %v180 = vld [vmem:[#allocation8 + $0x68] sm:$0xff]
    %v181 = vld [vmem:[#allocation8 + $0x70] sm:$0xff]
    %v182 = vld [vmem:[#allocation8 + $0x78] sm:$0xff]
    %183 = vmatprep.subr.mxu0 0.0
    %184 = vmatpush1.msra.mxu0 %v167
    %185 = vmatprep.subr.mxu0 0.0
    %186 = vmatpush1.msra.mxu0 %v168
    %187 = vmatprep.subr.mxu0 0.0
    %188 = vmatpush1.msra.mxu0 %v169
    %189 = vmatprep.subr.mxu0 0.0
    %190 = vmatpush1.msra.mxu0 %v170
    %191 = vmatprep.subr.mxu0 0.0
    %192 = vmatpush1.msra.mxu0 %v171
    %193 = vmatprep.subr.mxu0 0.0
    %194 = vmatpush1.msra.mxu0 %v172
    %195 = vmatprep.subr.mxu0 0.0
    %196 = vmatpush1.msra.mxu0 %v173
    %197 = vmatprep.subr.mxu0 0.0
    %198 = vmatpush1.msra.mxu0 %v174
    %199 = vmatprep.subr.mxu0 0.0
    %200 = vmatpush1.msra.mxu0 %v175
    %201 = vmatprep.subr.mxu0 0.0
    %202 = vmatpush1.msra.mxu0 %v176
    %203 = vmatprep.subr.mxu0 0.0
    %204 = vmatpush1.msra.mxu0 %v177
    %205 = vmatprep.subr.mxu0 0.0
    %206 = vmatpush1.msra.mxu0 %v178
    %207 = vmatprep.subr.mxu0 0.0
    %208 = vmatpush1.msra.mxu0 %v179
    %209 = vmatprep.subr.mxu0 0.0
    %210 = vmatpush1.msra.mxu0 %v180
    %211 = vmatprep.subr.mxu0 0.0
    %212 = vmatpush1.msra.mxu0 %v181
    %213 = vmatprep.subr.mxu0 0.0
    %214 = vmatpush1.msra.mxu0 %v182
    %215 = vmatprep.subr.mxu0 0.0
    %216 = vmatpush1.msra.mxu0 0.0
    %217 = vmatprep.subr.mxu0 0.0
    %218 = vmatpush1.msra.mxu0 0.0
    %219 = vmatprep.subr.mxu0 0.0
    %220 = vmatpush1.msra.mxu0 0.0
    %221 = vmatprep.subr.mxu0 0.0
    %222 = vmatpush1.msra.mxu0 0.0
    %223 = vmatprep.subr.mxu0 0.0
    %224 = vmatpush1.msra.mxu0 0.0
    %225 = vmatprep.subr.mxu0 0.0
    %226 = vmatpush1.msra.mxu0 0.0
    %227 = vmatprep.subr.mxu0 0.0
    %228 = vmatpush1.msra.mxu0 0.0
    %229 = vmatprep.subr.mxu0 0.0
    %230 = vmatpush1.msra.mxu0 0.0
    %231 = vmatprep.subr.mxu0 0.0
    %232 = vmatpush1.msra.mxu0 0.0
    %233 = vmatprep.subr.mxu0 0.0
    %234 = vmatpush1.msra.mxu0 0.0
    %235 = vmatprep.subr.mxu0 0.0
    %236 = vmatpush1.msra.mxu0 0.0
    %237 = vmatprep.subr.mxu0 0.0
    %238 = vmatpush1.msra.mxu0 0.0
    %239 = vmatprep.subr.mxu0 0.0
    %240 = vmatpush1.msra.mxu0 0.0
    %241 = vmatprep.subr.mxu0 0.0
    %242 = vmatpush1.msra.mxu0 0.0
    %243 = vmatprep.subr.mxu0 0.0
    %244 = vmatpush1.msra.mxu0 0.0
    %245 = vmatprep.subr.mxu0 0.0
    %246 = vmatpush1.msra.mxu0 0.0
    %247 = vmatprep.mubr.f32.mxu0 0.0
    %248 = vmatmul.mubr.f32.gmra.mrb[0].mxu0 %v163
    %v249 = vpop.f32.mrb[0].mxu0
    %v250 = vadd.f32 0.0, %v249
    %v251 = vpop.f32.mrb[0].mxu0
    %252 = vmatprep.mubr.f32.mxu0 0.0
    %253 = vmatmul.mubr.f32.gmra.mrb[0].mxu0 %v164
    %v254 = vpop.f32.mrb[0].mxu0
    %v255 = vadd.f32 0.0, %v254
    %v256 = vpop.f32.mrb[0].mxu0
    %257 = vdwg.mxu0
    %v258 = vadd.f32 %v165, %v250
    %v259 = vadd.f32 %v166, %v255
    %260 = vst [vmem:[#allocation2] sm:$0xff] %v258
    %261 = vst [vmem:[#allocation2 + $0x8] sm:$0xff] %v259
    // Predicated region
    $region30: #{tpu_custom_call.1} parent=1 // pred_check
      %p262 = pneg %p56
    $region31: #{tpu_custom_call.1} parent=1 // pred_check_branch
      %264 = sbr.rel (%p262) target = $region33
    $region32: #{tpu_custom_call.1} parent=1 // pred_region
      %v265 = vld [vmem:[#allocation2] sm:$0xff]
      %v266 = vld [vmem:[#allocation2 + $0x8] sm:$0xff]
      %267 = vst [vmem:[#allocation9] sm:$0xff] %v265
      %268 = vst [vmem:[#allocation9 + $0x8] sm:$0xff] %v266
    $region33: #{tpu_custom_call.1} parent=1 // pred_fallthru
      _
    // Predicated region
    $region34: #{tpu_custom_call.1} parent=1 // pred_check
      _
    $region35: #{tpu_custom_call.1} parent=1 // pred_check_branch
      %270 = sbr.rel (0) target = $region37
    $region36: #{tpu_custom_call.1} parent=1 // pred_region
      %s272 = ssub.s32 256, 256
      %273 = vsyncadd [#allocation5], %s272
      %s274 = sshll.u32 [#allocation9], 4
      %s275 = int_to_ptr.vmem [resolvable:$true] %s274
      %280 = dma.vmem_to_hbm [thread:$0]  %s275, 256, %s3, [#allocation5], 128, 128, 8
    $region37: #{tpu_custom_call.1} parent=1 // pred_fallthru
      _
    // Predicated region
    $region38: #{tpu_custom_call.1} parent=1 // pred_check
      _
    $region39: #{tpu_custom_call.1} parent=1 // pred_check_branch
      %282 = sbr.rel (0) target = $region41
    $region40: #{tpu_custom_call.1} parent=1 // pred_region
      %283 = dma.done [#allocation5], 256
    $region41: #{tpu_custom_call.1} parent=1 // pred_fallthru
      _
    %284 = vsyncpa [#allocation4], 1
    %285 = vsyncpa [#allocation7], 1
    %286 = vsyncpa [#allocation5], 1

</llo_original>
